<compile_context>
chip_gen: v6e
topology: v6e:2x2x1
jax: 0.10.0
libtpu: 0.0.40
codegen_flags: <defaults>
</compile_context>

<pallas_src>
import jax
import jax.numpy as jnp
from jax.experimental import pallas as pl
from jax.experimental.pallas import tpu as pltpu


_LANE = 512        # slab width: multiple of 128 -> full-width unmasked vld/vst
_TILE_ROWS = 512   # rows per block; f32: 512*512*4B = 1 MiB/block
                   # -> 4 MiB total with double-buffered in+out (v7x-safe)


def _copy_kernel(x_ref, o_ref):
    # Straight ref-to-ref passthrough; the whole forward is "return outs[-1]".
    o_ref[...] = x_ref[...]


def _identity_copy_pallas(x: jax.Array) -> jax.Array:
    """Bit-exact copy of `x` via a lane-dense, tiled, double-buffered pipeline."""
    orig_shape = x.shape
    orig_dtype = x.dtype
    total = x.size
    flat = x.reshape(-1)

    rows = -(-total // _LANE)  # cdiv
    if rows <= _TILE_ROWS:
        # Small tensor: single full-array block. Full dims always satisfy the
        # (8,128) tiling rule, and there is nothing to pipeline anyway.
        pad_rows = rows
        tile_r = rows
    else:
        # Large tensor: tile the row axis so the pipeline can overlap DMAs.
        pad_rows = -(-rows // _TILE_ROWS) * _TILE_ROWS
        tile_r = _TILE_ROWS

    padded_total = pad_rows * _LANE
    if padded_total != total:
        flat = jnp.pad(flat, (0, padded_total - total))
    x2d = flat.reshape(pad_rows, _LANE)

    grid = (pad_rows // tile_r,)

    y2d = pl.pallas_call(
        _copy_kernel,
        out_shape=jax.ShapeDtypeStruct((pad_rows, _LANE), orig_dtype),
        grid=grid,
        in_specs=[pl.BlockSpec((tile_r, _LANE), lambda i: (i, 0))],
        out_specs=pl.BlockSpec((tile_r, _LANE), lambda i: (i, 0)),
        compiler_params=pltpu.CompilerParams(
            # "parallel": v7x shards grid steps across its 2 TCs; neutral on
            # single-TC v5e/v6e.
            dimension_semantics=("parallel",),
        ),
    )(x2d)

    y = y2d.reshape(-1)
    if padded_total != total:
        y = y[:total]
    return y.reshape(orig_shape)


class UseIndexSingleOutNeck:
    """JAX/Pallas port of mmseg UseIndexSingleOutNeck (no parameters).

    materialize=False returns outs[-1] directly (zero-copy, the optimal path);
    materialize=True routes the selected feature map through the Pallas copy.
    """

    def __init__(self, index: int = -1, materialize: bool = True):
        self.index = index            # stored but unused, matching the reference
        self.materialize = materialize

    def __call__(self, outs):
        x = outs[-1]                  # reference forward ignores self.index
        if not self.materialize:
            return x                  # no kernel: zero HBM traffic, zero launch
        return _identity_copy_pallas(x)


if __name__ == "__main__":
    key = jax.random.PRNGKey(0)
    k0, k1, k2 = jax.random.split(key, 3)

    # Small multi-scale feature pyramid (NCHW), like an FPN output list.
    outs = [
        jax.random.normal(k0, (2, 4, 16, 16), dtype=jnp.float32),
        jax.random.normal(k1, (2, 8, 8, 8), dtype=jnp.float32),
        jax.random.normal(k2, (2, 16, 4, 4), dtype=jnp.float32),
    ]

    neck = UseIndexSingleOutNeck(index=-1)
    y = neck(outs)
    y = jax.block_until_ready(y)

    # Bit-exact identity of the last feature map.
    assert y.shape == outs[-1].shape
    assert y.dtype == outs[-1].dtype
    assert bool(jnp.all(y == outs[-1]))

    # Also exercise the zero-copy path (the recommended production setting).
    y0 = UseIndexSingleOutNeck(materialize=False)(outs)
    assert y0 is outs[-1]

    print("KERNEL_OK")
</pallas_src>

<mosaic_0001>
module attributes {stable_mosaic.version = 11 : i64} {
  func.func @_copy_kernel(%arg0: i32, %arg1: memref<1x512xf32, #tpu.memory_space<vmem>>, %arg2: memref<1x512xf32, #tpu.memory_space<vmem>>) attributes {dimension_semantics = [#tpu.dimension_semantics<parallel>], iteration_bounds = array<i64: 1>, scalar_prefetch = 0 : i64, scratch_operands = 0 : i64, tpu.core_type = #tpu.core_type<tc>, window_params = [{transform_indices = @transform_0, window_bounds = array<i64: 1, 512>}, {transform_indices = @transform_1, window_bounds = array<i64: 1, 512>}]} {
    %c0 = arith.constant 0 : index
    %c0_0 = arith.constant 0 : index
    %0 = vector.load %arg1[%c0, %c0_0] : memref<1x512xf32, #tpu.memory_space<vmem>>, vector<1x512xf32>
    %c0_1 = arith.constant 0 : index
    %c0_2 = arith.constant 0 : index
    %1 = vector.load %arg2[%c0_1, %c0_2] : memref<1x512xf32, #tpu.memory_space<vmem>>, vector<1x512xf32>
    tpu.vector_store %arg2[%c0_1, %c0_2], %0 {strides = array<i32>} : memref<1x512xf32, #tpu.memory_space<vmem>>, vector<1x512xf32>,
    return
  }
  func.func @transform_0(%arg0: i32) -> (i32, i32) {
    %c0_i32 = arith.constant 0 : i32
    %c0_i32_0 = arith.constant 0 : i32
    return %arg0, %c0_i32 : i32, i32
  }
  func.func @transform_1(%arg0: i32) -> (i32, i32) {
    %c0_i32 = arith.constant 0 : i32
    %c0_i32_0 = arith.constant 0 : i32
    return %arg0, %c0_i32 : i32, i32
  }
}

</mosaic_0001>

<llo_original>
// kernel: tpu_custom_call.1
$region0: #{tpu_custom_call.1}
  #allocation0 [shape = 'u32[]', space=smem, size = 0x4, offset = 0x4, fixed_abs, tag = 'smem constant byte address 0x4 - core index']
  #allocation1 [shape = 'u32[144,128]{1,0:T(1,128)}', space=vmem, size = 0x12000, scoped, tag = 'internal scratch']
  %s0 = inlined_call_operand.hbm [shape: f32[1,512], index: 0, kind: input, shape index: {}]
  %s1 = inlined_call_operand.hbm [shape: f32[1,512], index: 1, kind: output, shape index: {}]
  %s2 = sld [smem:[#allocation0]]
  $region18: #{tpu_custom_call.1} parent=0
    _
  %s4 = ssub.s32 1, %s2
  %s5 = scalar_select 0, %s4, %s2
  $region1: #{tpu_custom_call.1} parent=0
    #allocation2 [shape = 'u8[2048]{0}', space=vmem, size = 0x800, scoped, tag = 'input window, operand 0, single buffered']
    #allocation3 [shape = 's32[1]{0}', space=sflag, size = 0x4, scoped, tag = 'scoped memory for tpu_custom_call.1']
    #allocation4 [shape = 's32[1]{0}', space=sflag, size = 0x4, scoped, tag = 'scoped memory for tpu_custom_call.1']
    #allocation5 [shape = 'u8[2048]{0}', space=vmem, size = 0x800, scoped, tag = 'output window, operand 0, single buffered']
    %6 = vsyncpa [#allocation3], 0
    %7 = vsyncpa [#allocation4], 0
    // Predicated region
    $region2: #{tpu_custom_call.1} parent=1 // pred_check
      _
    $region3: #{tpu_custom_call.1} parent=1 // pred_check_branch
      %9 = sbr.rel (0) target = $region5
    $region4: #{tpu_custom_call.1} parent=1 // pred_region
      %s11 = ssub.s32 64, 64
      %12 = vsyncadd [#allocation3], %s11
      %s14 = sshll.u32 [#allocation2], 4
      %s15 = int_to_ptr.vmem [resolvable:$true] %s14
      %17 = dma.hbm_to_vmem [thread:$0]  %s0, 64, %s15, [#allocation3]
    $region5: #{tpu_custom_call.1} parent=1 // pred_fallthru
      _
    // Predicated region
    $region6: #{tpu_custom_call.1} parent=1 // pred_check
      _
    $region7: #{tpu_custom_call.1} parent=1 // pred_check_branch
      %19 = sbr.rel (0) target = $region9
    $region8: #{tpu_custom_call.1} parent=1 // pred_region
      %20 = dma.done [#allocation3], 64
    $region9: #{tpu_custom_call.1} parent=1 // pred_fallthru
      _
    %v21 = vld [vmem:[#allocation2] sm:$0xf]
    %v22 = vlaneseq
    %vm23 = vcmp.ge.s32.totalorder %v22, 0
    %vm24 = vcmp.lt.s32.totalorder %v22, 512
    %vm25 = vmand %vm23, %vm24
    %26 = vst.msk [vmem:[#allocation5] sm:$0xf] %vm25, %v21
    // Predicated region
    $region10: #{tpu_custom_call.1} parent=1 // pred_check
      _
    $region11: #{tpu_custom_call.1} parent=1 // pred_check_branch
      %28 = sbr.rel (0) target = $region13
    $region12: #{tpu_custom_call.1} parent=1 // pred_region
      %s30 = ssub.s32 64, 64
      %31 = vsyncadd [#allocation4], %s30
      %s33 = sshll.u32 [#allocation5], 4
      %s34 = int_to_ptr.vmem [resolvable:$true] %s33
      %36 = dma.vmem_to_hbm [thread:$0]  %s34, 64, %s1, [#allocation4]
    $region13: #{tpu_custom_call.1} parent=1 // pred_fallthru
      _
    // Predicated region
    $region14: #{tpu_custom_call.1} parent=1 // pred_check
      _
    $region15: #{tpu_custom_call.1} parent=1 // pred_check_branch
      %38 = sbr.rel (0) target = $region17
    $region16: #{tpu_custom_call.1} parent=1 // pred_region
      %39 = dma.done [#allocation4], 64
    $region17: #{tpu_custom_call.1} parent=1 // pred_fallthru
      _
    %40 = vsyncpa [#allocation3], 1
    %41 = vsyncpa [#allocation4], 1

</llo_original>
